<compile_context>
chip_gen: v7x
topology: tpu7x:2x2x1
jax: 0.10.0
libtpu: 0.0.40
codegen_flags: <defaults>
</compile_context>

<pallas_src>
import jax
import jax.numpy as jnp
from jax.experimental import pallas as pl
from jax.experimental.pallas import tpu as pltpu


def _round_up(x, m):
    return ((x + m - 1) // m) * m


def _make_fc_vi_kernel(apply_relu):
    def kernel(x_ref, wm_ref, wlv_ref, ew_ref, bm_ref, blv_ref, eb_ref, o_ref):
        k = pl.program_id(2)

        @pl.when(k == 0)
        def _init():
            # Output block is resident across K (index_map ignores k): use it
            # directly as the f32 accumulator (no extra VMEM scratch).
            o_ref[...] = jnp.zeros_like(o_ref)

        # Reparameterized weight sample for this (tk, tn) tile.  Params may be
        # stored in bf16 in HBM; the elementwise math is done in f32 on
        # VPU/EUP (safe on v5e which has no bf16 VPU/EUP).
        wm = wm_ref[...].astype(jnp.float32)
        wlv = wlv_ref[...].astype(jnp.float32)
        ew = ew_ref[...].astype(jnp.float32)
        w = ew * jnp.exp(0.5 * wlv) + wm

        # TODO(synk): once HBM traffic is cut (bf16 + in-kernel RNG) and the
        # kernel turns MXU-bound for large B, cast x and w to bf16 here
        # (keeping preferred_element_type=f32) to cut MXU passes ~4x.
        o_ref[...] += jnp.dot(
            x_ref[...].astype(jnp.float32), w,
            preferred_element_type=jnp.float32)

        @pl.when(k == pl.num_programs(2) - 1)
        def _finalize():
            # Bias sample computed once per output tile (not per K step).
            bm = bm_ref[...].astype(jnp.float32)
            blv = blv_ref[...].astype(jnp.float32)
            eb = eb_ref[...].astype(jnp.float32)
            b = eb * jnp.exp(0.5 * blv) + bm          # (1, tn), broadcasts
            y = o_ref[...] + b
            if apply_relu:
                y = jnp.maximum(y, 0.0)
            o_ref[...] = y.astype(o_ref.dtype)

    return kernel


def fc_vi_forward(x, w_mean, w_logvar, eps_w, b_mean, b_logvar, eps_b,
                  activation="relu", param_dtype=jnp.bfloat16,
                  max_tm=512, max_tk=1024, max_tn=1024):
    """Pallas-backed FC_VI forward.

    x:        (B, indim)  float32
    w_mean, w_logvar, eps_w: (indim, outdim) -- streamed in `param_dtype`
    b_mean, b_logvar, eps_b: (outdim,)       float32
    """
    B, indim = x.shape
    indim2, outdim = w_mean.shape
    assert indim == indim2

    # --- tile sizes (tm mult. of 8; tk/tn mult. of 128, so bf16's 16-row
    # sublane packing is automatically satisfied) ---
    tm = min(max_tm, _round_up(B, 8))
    tk = min(max_tk, _round_up(indim, 128))
    tn = min(max_tn, _round_up(outdim, 128))

    # --- pad to tile multiples (zero padding keeps the math exact:
    # padded w = 0*exp(0)+0 = 0, padded bias = 0, relu(0) = 0) ---
    B_pad = _round_up(B, tm)
    K_pad = _round_up(indim, tk)
    N_pad = _round_up(outdim, tn)

    def pad2(a, r, c):
        return jnp.pad(a, ((0, r - a.shape[0]), (0, c - a.shape[1])))

    x_p = pad2(x.astype(jnp.float32), B_pad, K_pad)
    wm_p = pad2(w_mean.astype(param_dtype), K_pad, N_pad)
    wlv_p = pad2(w_logvar.astype(param_dtype), K_pad, N_pad)
    ew_p = pad2(eps_w.astype(param_dtype), K_pad, N_pad)
    bm_p = pad2(b_mean.reshape(1, outdim).astype(jnp.float32), 1, N_pad)
    blv_p = pad2(b_logvar.reshape(1, outdim).astype(jnp.float32), 1, N_pad)
    eb_p = pad2(eps_b.reshape(1, outdim).astype(jnp.float32), 1, N_pad)

    m_blocks = B_pad // tm
    n_blocks = N_pad // tn
    k_blocks = K_pad // tk
    grid = (m_blocks, n_blocks, k_blocks)
    kernel = _make_fc_vi_kernel(activation == "relu")

    param_bytes = jnp.dtype(param_dtype).itemsize
    cost = pl.CostEstimate(
        # matmul + weight sample (2 mul + add per element, re-done per M block)
        flops=2 * B_pad * K_pad * N_pad
              + 3 * K_pad * N_pad * m_blocks
              + 3 * B_pad * N_pad,
        transcendentals=K_pad * N_pad * m_blocks + N_pad * m_blocks * n_blocks,
        bytes_accessed=(3 * K_pad * N_pad * m_blocks * param_bytes   # weights per M block
                        + B_pad * K_pad * n_blocks * 4               # x per N block
                        + B_pad * N_pad * 4                          # output
                        + 3 * N_pad * 4 * m_blocks * n_blocks),      # bias
    )

    out = pl.pallas_call(
        kernel,
        out_shape=jax.ShapeDtypeStruct((B_pad, N_pad), jnp.float32),
        grid_spec=pltpu.PrefetchScalarGridSpec(
            num_scalar_prefetch=0,
            grid=grid,
            in_specs=[
                pl.BlockSpec((tm, tk), lambda m, n, k: (m, k)),   # x
                pl.BlockSpec((tk, tn), lambda m, n, k: (k, n)),   # w_mean
                pl.BlockSpec((tk, tn), lambda m, n, k: (k, n)),   # w_logvar
                pl.BlockSpec((tk, tn), lambda m, n, k: (k, n)),   # eps_w
                pl.BlockSpec((1, tn), lambda m, n, k: (0, n)),    # b_mean
                pl.BlockSpec((1, tn), lambda m, n, k: (0, n)),    # b_logvar
                pl.BlockSpec((1, tn), lambda m, n, k: (0, n)),    # eps_b
            ],
            out_specs=pl.BlockSpec((tm, tn), lambda m, n, k: (m, n)),
        ),
        compiler_params=pltpu.CompilerParams(
            dimension_semantics=("parallel", "parallel", "arbitrary"),
            # Double-buffered working set at 512x1024x1024 tiles is ~20 MiB
            # (bf16 params) / ~32 MiB (f32 params): above v5e's 16 MiB scoped
            # default, below v7x's 64 MiB physical VMEM.
            vmem_limit_bytes=48 * 1024 * 1024),
        cost_estimate=cost,
    )(x_p, wm_p, wlv_p, ew_p, bm_p, blv_p, eb_p)

    return out[:B, :outdim]


if __name__ == "__main__":
    # Small, deterministic setup consistent with FC_VI(indim, outdim, 'relu', ...)
    B, indim, outdim = 8, 32, 64
    activation = "relu"

    key = jax.random.PRNGKey(0)
    k1, k2, k3, k4, k5, k6, k7 = jax.random.split(key, 7)

    # Parameters (torch.randn init in the module's __init__)
    w_mean = jax.random.normal(k1, (indim, outdim), dtype=jnp.float32)
    w_logvar = jax.random.normal(k2, (indim, outdim), dtype=jnp.float32)
    b_mean = jax.random.normal(k3, (outdim,), dtype=jnp.float32)
    b_logvar = jax.random.normal(k4, (outdim,), dtype=jnp.float32)

    # Per-forward reparameterization noise (sampler_w.normal_(), sampler_b.normal_())
    eps_w = jax.random.normal(k5, (indim, outdim), dtype=jnp.float32)
    eps_b = jax.random.normal(k6, (outdim,), dtype=jnp.float32)

    # Input
    x = jax.random.normal(k7, (B, indim), dtype=jnp.float32)

    param_dtype = jnp.bfloat16   # HBM storage dtype for the 3 weight streams
    y = fc_vi_forward(x, w_mean, w_logvar, eps_w, b_mean, b_logvar, eps_b,
                      activation=activation, param_dtype=param_dtype)
    y = jax.block_until_ready(y)

    # Pure-JAX reference with the same parameter-storage rounding the kernel
    # sees (bf16-stored weight streams, f32 on-chip math).
    wm = w_mean.astype(param_dtype).astype(jnp.float32)
    wlv = w_logvar.astype(param_dtype).astype(jnp.float32)
    ew = eps_w.astype(param_dtype).astype(jnp.float32)
    w_s = ew * jnp.exp(0.5 * wlv) + wm
    b_s = eps_b * jnp.exp(0.5 * b_logvar) + b_mean
    ref = jnp.maximum(x @ w_s + b_s, 0.0)

    assert y.shape == ref.shape, "shape mismatch vs reference"
    assert jnp.allclose(y, ref, atol=1e-3, rtol=1e-4), "mismatch vs reference"

    print("KERNEL_OK")
</pallas_src>

<mosaic_0001>
module attributes {stable_mosaic.version = 11 : i64} {
  func.func @kernel(%arg0: i32, %arg1: i32, %arg2: i32, %arg3: memref<8x128xf32, #tpu.memory_space<vmem>>, %arg4: memref<128x128xbf16, #tpu.memory_space<vmem>>, %arg5: memref<128x128xbf16, #tpu.memory_space<vmem>>, %arg6: memref<128x128xbf16, #tpu.memory_space<vmem>>, %arg7: memref<1x128xf32, #tpu.memory_space<vmem>>, %arg8: memref<1x128xf32, #tpu.memory_space<vmem>>, %arg9: memref<1x128xf32, #tpu.memory_space<vmem>>, %arg10: memref<8x128xf32, #tpu.memory_space<vmem>>) attributes {dimension_semantics = [#tpu.dimension_semantics<parallel>, #tpu.dimension_semantics<parallel>, #tpu.dimension_semantics<arbitrary>], iteration_bounds = array<i64: 1, 1, 1>, scalar_prefetch = 0 : i64, scratch_operands = 0 : i64, tpu.core_type = #tpu.core_type<tc>, window_params = [{transform_indices = @transform_0, window_bounds = array<i64: 8, 128>}, {transform_indices = @transform_1, window_bounds = array<i64: 128, 128>}, {transform_indices = @transform_2, window_bounds = array<i64: 128, 128>}, {transform_indices = @transform_3, window_bounds = array<i64: 128, 128>}, {transform_indices = @transform_4, window_bounds = array<i64: 1, 128>}, {transform_indices = @transform_5, window_bounds = array<i64: 1, 128>}, {transform_indices = @transform_6, window_bounds = array<i64: 1, 128>}, {transform_indices = @transform_7, window_bounds = array<i64: 8, 128>}]} {
    %c0_i32 = arith.constant 0 : i32
    %0 = arith.cmpi eq, %arg2, %c0_i32 : i32
    %1 = arith.extui %0 : i1 to i32
    %c0_i32_0 = arith.constant 0 : i32
    %2 = arith.cmpi ne, %1, %c0_i32_0 : i32
    scf.if %2 {
      %cst_15 = arith.constant 0.000000e+00 : f32
      %22 = vector.broadcast %cst_15 : f32 to vector<8x128xf32>
      %c0_16 = arith.constant 0 : index
      %c0_17 = arith.constant 0 : index
      %23 = vector.load %arg10[%c0_16, %c0_17] : memref<8x128xf32, #tpu.memory_space<vmem>>, vector<8x128xf32>
      tpu.vector_store %arg10[%c0_16, %c0_17], %22 {strides = array<i32>} : memref<8x128xf32, #tpu.memory_space<vmem>>, vector<8x128xf32>,
    } else {
    }
    %c0 = arith.constant 0 : index
    %c0_1 = arith.constant 0 : index
    %3 = vector.load %arg4[%c0, %c0_1] : memref<128x128xbf16, #tpu.memory_space<vmem>>, vector<128x128xbf16>
    %4 = arith.extf %3 : vector<128x128xbf16> to vector<128x128xf32>
    %c0_2 = arith.constant 0 : index
    %c0_3 = arith.constant 0 : index
    %5 = vector.load %arg5[%c0_2, %c0_3] : memref<128x128xbf16, #tpu.memory_space<vmem>>, vector<128x128xbf16>
    %6 = arith.extf %5 : vector<128x128xbf16> to vector<128x128xf32>
    %c0_4 = arith.constant 0 : index
    %c0_5 = arith.constant 0 : index
    %7 = vector.load %arg6[%c0_4, %c0_5] : memref<128x128xbf16, #tpu.memory_space<vmem>>, vector<128x128xbf16>
    %8 = arith.extf %7 : vector<128x128xbf16> to vector<128x128xf32>
    %cst = arith.constant 5.000000e-01 : f32
    %9 = vector.broadcast %cst : f32 to vector<128x128xf32>
    %10 = arith.mulf %9, %6 : vector<128x128xf32>
    %11 = math.exp %10 : vector<128x128xf32>
    %12 = arith.mulf %8, %11 : vector<128x128xf32>
    %13 = arith.addf %12, %4 : vector<128x128xf32>
    %c0_6 = arith.constant 0 : index
    %c0_7 = arith.constant 0 : index
    %14 = vector.load %arg10[%c0_6, %c0_7] : memref<8x128xf32, #tpu.memory_space<vmem>>, vector<8x128xf32>
    %c0_8 = arith.constant 0 : index
    %c0_9 = arith.constant 0 : index
    %15 = vector.load %arg3[%c0_8, %c0_9] : memref<8x128xf32, #tpu.memory_space<vmem>>, vector<8x128xf32>
    %cst_10 = arith.constant dense<0.000000e+00> : vector<8x128xf32>
    %16 = tpu.matmul %15, %13, %cst_10 {dimension_numbers = #tpu.dot_dimension_numbers<[1], [0], [0], [1], [0, 0, 1, 1], [], []>} : vector<8x128xf32>, vector<128x128xf32>, vector<8x128xf32> -> vector<8x128xf32>
    %17 = arith.addf %14, %16 : vector<8x128xf32>
    %c0_11 = arith.constant 0 : index
    %c0_12 = arith.constant 0 : index
    %18 = vector.load %arg10[%c0_11, %c0_12] : memref<8x128xf32, #tpu.memory_space<vmem>>, vector<8x128xf32>
    tpu.vector_store %arg10[%c0_11, %c0_12], %17 {strides = array<i32>} : memref<8x128xf32, #tpu.memory_space<vmem>>, vector<8x128xf32>,
    %c0_i32_13 = arith.constant 0 : i32
    %19 = arith.cmpi eq, %arg2, %c0_i32_13 : i32
    %20 = arith.extui %19 : i1 to i32
    %c0_i32_14 = arith.constant 0 : i32
    %21 = arith.cmpi ne, %20, %c0_i32_14 : i32
    scf.if %21 {
      %c0_15 = arith.constant 0 : index
      %c0_16 = arith.constant 0 : index
      %22 = vector.load %arg7[%c0_15, %c0_16] : memref<1x128xf32, #tpu.memory_space<vmem>>, vector<1x128xf32>
      %c0_17 = arith.constant 0 : index
      %c0_18 = arith.constant 0 : index
      %23 = vector.load %arg8[%c0_17, %c0_18] : memref<1x128xf32, #tpu.memory_space<vmem>>, vector<1x128xf32>
      %c0_19 = arith.constant 0 : index
      %c0_20 = arith.constant 0 : index
      %24 = vector.load %arg9[%c0_19, %c0_20] : memref<1x128xf32, #tpu.memory_space<vmem>>, vector<1x128xf32>
      %cst_21 = arith.constant 5.000000e-01 : f32
      %25 = vector.broadcast %cst_21 : f32 to vector<1x128xf32>
      %26 = arith.mulf %25, %23 : vector<1x128xf32>
      %27 = math.exp %26 : vector<1x128xf32>
      %28 = arith.mulf %24, %27 : vector<1x128xf32>
      %29 = arith.addf %28, %22 : vector<1x128xf32>
      %c0_22 = arith.constant 0 : index
      %c0_23 = arith.constant 0 : index
      %30 = vector.load %arg10[%c0_22, %c0_23] : memref<8x128xf32, #tpu.memory_space<vmem>>, vector<8x128xf32>
      %31 = vector.broadcast %29 : vector<1x128xf32> to vector<8x128xf32>
      %32 = arith.addf %30, %31 : vector<8x128xf32>
      %cst_24 = arith.constant 0.000000e+00 : f32
      %33 = vector.broadcast %cst_24 : f32 to vector<8x128xf32>
      %34 = arith.maximumf %32, %33 : vector<8x128xf32>
      %c0_25 = arith.constant 0 : index
      %c0_26 = arith.constant 0 : index
      %35 = vector.load %arg10[%c0_25, %c0_26] : memref<8x128xf32, #tpu.memory_space<vmem>>, vector<8x128xf32>
      tpu.vector_store %arg10[%c0_25, %c0_26], %34 {strides = array<i32>} : memref<8x128xf32, #tpu.memory_space<vmem>>, vector<8x128xf32>,
    } else {
    }
    return
  }
  func.func @transform_0(%arg0: i32, %arg1: i32, %arg2: i32) -> (i32, i32) {
    %c0_i32 = arith.constant 0 : i32
    return %arg0, %arg2 : i32, i32
  }
  func.func @transform_1(%arg0: i32, %arg1: i32, %arg2: i32) -> (i32, i32) {
    %c0_i32 = arith.constant 0 : i32
    return %arg2, %arg1 : i32, i32
  }
  func.func @transform_2(%arg0: i32, %arg1: i32, %arg2: i32) -> (i32, i32) {
    %c0_i32 = arith.constant 0 : i32
    return %arg2, %arg1 : i32, i32
  }
  func.func @transform_3(%arg0: i32, %arg1: i32, %arg2: i32) -> (i32, i32) {
    %c0_i32 = arith.constant 0 : i32
    return %arg2, %arg1 : i32, i32
  }
  func.func @transform_4(%arg0: i32, %arg1: i32, %arg2: i32) -> (i32, i32) {
    %c0_i32 = arith.constant 0 : i32
    %c0_i32_0 = arith.constant 0 : i32
    return %c0_i32, %arg1 : i32, i32
  }
  func.func @transform_5(%arg0: i32, %arg1: i32, %arg2: i32) -> (i32, i32) {
    %c0_i32 = arith.constant 0 : i32
    %c0_i32_0 = arith.constant 0 : i32
    return %c0_i32, %arg1 : i32, i32
  }
  func.func @transform_6(%arg0: i32, %arg1: i32, %arg2: i32) -> (i32, i32) {
    %c0_i32 = arith.constant 0 : i32
    %c0_i32_0 = arith.constant 0 : i32
    return %c0_i32, %arg1 : i32, i32
  }
  func.func @transform_7(%arg0: i32, %arg1: i32, %arg2: i32) -> (i32, i32) {
    %c0_i32 = arith.constant 0 : i32
    return %arg0, %arg1 : i32, i32
  }
}

</mosaic_0001>

<llo_original>
// kernel: tpu_custom_call.1
$region0: #{tpu_custom_call.1}
  #allocation0 [shape = 'u32[]', space=smem, size = 0x4, offset = 0x4, fixed_abs, tag = 'smem constant byte address 0x4 - core index']
  #allocation1 [shape = 'u32[144,128]{1,0:T(1,128)}', space=vmem, size = 0x12000, scoped, tag = 'internal scratch']
  %s0 = inlined_call_operand.hbm [shape: f32[8,128], index: 0, kind: input, shape index: {}]
  %s1 = inlined_call_operand.hbm [shape: bf16[128,128], index: 1, kind: input, shape index: {}]
  %s2 = inlined_call_operand.hbm [shape: bf16[128,128], index: 2, kind: input, shape index: {}]
  %s3 = inlined_call_operand.hbm [shape: bf16[128,128], index: 3, kind: input, shape index: {}]
  %s4 = inlined_call_operand.vmem [shape: f32[1,128], index: 4, kind: input, shape index: {}]
  %s5 = inlined_call_operand.vmem [shape: f32[1,128], index: 5, kind: input, shape index: {}]
  %s6 = inlined_call_operand.vmem [shape: f32[1,128], index: 6, kind: input, shape index: {}]
  %s7 = inlined_call_operand.hbm [shape: f32[8,128], index: 7, kind: output, shape index: {}]
  %s8 = sld [smem:[#allocation0]]
  $region62: #{tpu_custom_call.1} parent=0
    _
  %s10 = ssub.s32 1, %s8
  %s11 = scalar_select 0, %s10, %s8
  $region1: #{tpu_custom_call.1} parent=0
    #allocation2 [shape = 'u8[4096]{0}', space=vmem, size = 0x1000, scoped, tag = 'input window, operand 0, single buffered']
    #allocation3 [shape = 's32[1]{0}', space=sflag, size = 0x4, scoped, tag = 'scoped memory for tpu_custom_call.1']
    #allocation4 [shape = 's32[1]{0}', space=sflag, size = 0x4, scoped, tag = 'scoped memory for tpu_custom_call.1']
    #allocation5 [shape = 'u8[32768]{0}', space=vmem, size = 0x8000, scoped, tag = 'input window, operand 1, single buffered']
    #allocation6 [shape = 's32[1]{0}', space=sflag, size = 0x4, scoped, tag = 'scoped memory for tpu_custom_call.1']
    #allocation7 [shape = 'u8[32768]{0}', space=vmem, size = 0x8000, scoped, tag = 'input window, operand 2, single buffered']
    #allocation8 [shape = 'u8[32768]{0}', space=vmem, size = 0x8000, scoped, tag = 'input window, operand 3, single buffered']
    #allocation9 [shape = 's32[1]{0}', space=sflag, size = 0x4, scoped, tag = 'scoped memory for tpu_custom_call.1']
    #allocation10 [shape = 'u8[4096]{0}', space=vmem, size = 0x1000, scoped, tag = 'output window, operand 0, single buffered']
    %12 = vsyncpa [#allocation3], 0
    %13 = vsyncpa [#allocation6], 0
    %14 = vsyncpa [#allocation9], 0
    %15 = vsyncpa [#allocation4], 0
    // Predicated region
    $region2: #{tpu_custom_call.1} parent=1 // pred_check
      _
    $region3: #{tpu_custom_call.1} parent=1 // pred_check_branch
      %17 = sbr.rel (0) target = $region5
    $region4: #{tpu_custom_call.1} parent=1 // pred_region
      %s19 = ssub.s32 128, 128
      %20 = vsyncadd [#allocation3], %s19
      %s22 = sshll.u32 [#allocation2], 4
      %s23 = int_to_ptr.vmem [resolvable:$true] %s22
      %25 = dma.hbm_to_vmem [thread:$0]  %s0, 128, %s23, [#allocation3]
    $region5: #{tpu_custom_call.1} parent=1 // pred_fallthru
      _
    // Predicated region
    $region6: #{tpu_custom_call.1} parent=1 // pred_check
      _
    $region7: #{tpu_custom_call.1} parent=1 // pred_check_branch
      %27 = sbr.rel (0) target = $region9
    $region8: #{tpu_custom_call.1} parent=1 // pred_region
      %s29 = ssub.s32 1024, 1024
      %30 = vsyncadd [#allocation6], %s29
      %s31 = sshll.u32 [#allocation5], 4
      %s32 = int_to_ptr.vmem [resolvable:$true] %s31
      %37 = dma.hbm_to_vmem [thread:$0]  %s1, 1024, %s32, [#allocation6], 64, 64, 4
    $region9: #{tpu_custom_call.1} parent=1 // pred_fallthru
      _
    // Predicated region
    $region10: #{tpu_custom_call.1} parent=1 // pred_check
      _
    $region11: #{tpu_custom_call.1} parent=1 // pred_check_branch
      %39 = sbr.rel (0) target = $region13
    $region12: #{tpu_custom_call.1} parent=1 // pred_region
      %s41 = ssub.s32 1024, 1024
      %42 = vsyncadd [#allocation6], %s41
      %s43 = sshll.u32 [#allocation7], 4
      %s44 = int_to_ptr.vmem [resolvable:$true] %s43
      %49 = dma.hbm_to_vmem [thread:$0]  %s2, 1024, %s44, [#allocation6], 64, 64, 4
    $region13: #{tpu_custom_call.1} parent=1 // pred_fallthru
      _
    // Predicated region
    $region14: #{tpu_custom_call.1} parent=1 // pred_check
      _
    $region15: #{tpu_custom_call.1} parent=1 // pred_check_branch
      %51 = sbr.rel (0) target = $region17
    $region16: #{tpu_custom_call.1} parent=1 // pred_region
      %s53 = ssub.s32 1024, 1024
      %54 = vsyncadd [#allocation9], %s53
      %s55 = sshll.u32 [#allocation8], 4
      %s56 = int_to_ptr.vmem [resolvable:$true] %s55
      %61 = dma.hbm_to_vmem [thread:$0]  %s3, 1024, %s56, [#allocation9], 64, 64, 4
    $region17: #{tpu_custom_call.1} parent=1 // pred_fallthru
      _
    // Predicated region
    $region18: #{tpu_custom_call.1} parent=1 // pred_check
      _
    $region19: #{tpu_custom_call.1} parent=1 // pred_check_branch
      %63 = sbr.rel (0) target = $region21
    $region20: #{tpu_custom_call.1} parent=1 // pred_region
      _
    $region21: #{tpu_custom_call.1} parent=1 // pred_fallthru
      _
    // Predicated region
    $region22: #{tpu_custom_call.1} parent=1 // pred_check
      _
    $region23: #{tpu_custom_call.1} parent=1 // pred_check_branch
      %65 = sbr.rel (0) target = $region25
    $region24: #{tpu_custom_call.1} parent=1 // pred_region
      _
    $region25: #{tpu_custom_call.1} parent=1 // pred_fallthru
      _
    // Predicated region
    $region26: #{tpu_custom_call.1} parent=1 // pred_check
      _
    $region27: #{tpu_custom_call.1} parent=1 // pred_check_branch
      %67 = sbr.rel (0) target = $region29
    $region28: #{tpu_custom_call.1} parent=1 // pred_region
      _
    $region29: #{tpu_custom_call.1} parent=1 // pred_fallthru
      _
    // Predicated region
    $region30: #{tpu_custom_call.1} parent=1 // pred_check
      _
    $region31: #{tpu_custom_call.1} parent=1 // pred_check_branch
      %69 = sbr.rel (0) target = $region33
    $region32: #{tpu_custom_call.1} parent=1 // pred_region
      %70 = dma.done [#allocation3], 128
    $region33: #{tpu_custom_call.1} parent=1 // pred_fallthru
      _
    // Predicated region
    $region34: #{tpu_custom_call.1} parent=1 // pred_check
      _
    $region35: #{tpu_custom_call.1} parent=1 // pred_check_branch
      %72 = sbr.rel (0) target = $region37
    $region36: #{tpu_custom_call.1} parent=1 // pred_region
      %73 = dma.done [#allocation6], 1024
    $region37: #{tpu_custom_call.1} parent=1 // pred_fallthru
      _
    // Predicated region
    $region38: #{tpu_custom_call.1} parent=1 // pred_check
      _
    $region39: #{tpu_custom_call.1} parent=1 // pred_check_branch
      %75 = sbr.rel (0) target = $region41
    $region40: #{tpu_custom_call.1} parent=1 // pred_region
      %76 = dma.done [#allocation6], 1024
    $region41: #{tpu_custom_call.1} parent=1 // pred_fallthru
      _
    // Predicated region
    $region42: #{tpu_custom_call.1} parent=1 // pred_check
      _
    $region43: #{tpu_custom_call.1} parent=1 // pred_check_branch
      %78 = sbr.rel (0) target = $region45
    $region44: #{tpu_custom_call.1} parent=1 // pred_region
      %79 = dma.done [#allocation9], 1024
    $region45: #{tpu_custom_call.1} parent=1 // pred_fallthru
      _
    %p80 = scmp.eq.s32.totalorder 0, 0
    // Predicated region
    $region46: #{tpu_custom_call.1} parent=1 // pred_check
      %p81 = pneg %p80
    $region47: #{tpu_custom_call.1} parent=1 // pred_check_branch
      %83 = sbr.rel (%p81) target = $region49
    $region48: #{tpu_custom_call.1} parent=1 // pred_region
      %84 = vst [vmem:[#allocation10] sm:$0xff] 0.0
    $region49: #{tpu_custom_call.1} parent=1 // pred_fallthru
      _
    %v85 = vld [vmem:[#allocation5] sm:$0xf]
    %v86 = vld [vmem:[#allocation5 + $0x4] sm:$0xf]
    %v87 = vld [vmem:[#allocation5 + $0x8] sm:$0xf]
    %v88 = vld [vmem:[#allocation5 + $0xc] sm:$0xf]
    %v89 = vld [vmem:[#allocation5 + $0x10] sm:$0xf]
    %v90 = vld [vmem:[#allocation5 + $0x14] sm:$0xf]
    %v91 = vld [vmem:[#allocation5 + $0x18] sm:$0xf]
    %v92 = vld [vmem:[#allocation5 + $0x1c] sm:$0xf]
    %v93 = vld [vmem:[#allocation5 + $0x20] sm:$0xf]
    %v94 = vld [vmem:[#allocation5 + $0x24] sm:$0xf]
    %v95 = vld [vmem:[#allocation5 + $0x28] sm:$0xf]
    %v96 = vld [vmem:[#allocation5 + $0x2c] sm:$0xf]
    %v97 = vld [vmem:[#allocation5 + $0x30] sm:$0xf]
    %v98 = vld [vmem:[#allocation5 + $0x34] sm:$0xf]
    %v99 = vld [vmem:[#allocation5 + $0x38] sm:$0xf]
    %v100 = vld [vmem:[#allocation5 + $0x3c] sm:$0xf]
    %v101 = vunpack.c.l.bf16 %v85
    %v102 = vunpack.c.l.bf16 %v86
    %v103 = vunpack.c.l.bf16 %v87
    %v104 = vunpack.c.l.bf16 %v88
    %v105 = vunpack.c.l.bf16 %v89
    %v106 = vunpack.c.l.bf16 %v90
    %v107 = vunpack.c.l.bf16 %v91
    %v108 = vunpack.c.l.bf16 %v92
    %v109 = vunpack.c.l.bf16 %v93
    %v110 = vunpack.c.l.bf16 %v94
    %v111 = vunpack.c.l.bf16 %v95
    %v112 = vunpack.c.l.bf16 %v96
    %v113 = vunpack.c.l.bf16 %v97
    %v114 = vunpack.c.l.bf16 %v98
    %v115 = vunpack.c.l.bf16 %v99
    %v116 = vunpack.c.l.bf16 %v100
    %v117 = vld [vmem:[#allocation7] sm:$0xf]
    %v118 = vld [vmem:[#allocation7 + $0x4] sm:$0xf]
    %v119 = vld [vmem:[#allocation7 + $0x8] sm:$0xf]
    %v120 = vld [vmem:[#allocation7 + $0xc] sm:$0xf]
    %v121 = vld [vmem:[#allocation7 + $0x10] sm:$0xf]
    %v122 = vld [vmem:[#allocation7 + $0x14] sm:$0xf]
    %v123 = vld [vmem:[#allocation7 + $0x18] sm:$0xf]
    %v124 = vld [vmem:[#allocation7 + $0x1c] sm:$0xf]
    %v125 = vld [vmem:[#allocation7 + $0x20] sm:$0xf]
    %v126 = vld [vmem:[#allocation7 + $0x24] sm:$0xf]
    %v127 = vld [vmem:[#allocation7 + $0x28] sm:$0xf]
    %v128 = vld [vmem:[#allocation7 + $0x2c] sm:$0xf]
    %v129 = vld [vmem:[#allocation7 + $0x30] sm:$0xf]
    %v130 = vld [vmem:[#allocation7 + $0x34] sm:$0xf]
    %v131 = vld [vmem:[#allocation7 + $0x38] sm:$0xf]
    %v132 = vld [vmem:[#allocation7 + $0x3c] sm:$0xf]
    %v133 = vunpack.c.l.bf16 %v117
    %v134 = vunpack.c.l.bf16 %v118
    %v135 = vunpack.c.l.bf16 %v119
    %v136 = vunpack.c.l.bf16 %v120
    %v137 = vunpack.c.l.bf16 %v121
    %v138 = vunpack.c.l.bf16 %v122
    %v139 = vunpack.c.l.bf16 %v123
    %v140 = vunpack.c.l.bf16 %v124
    %v141 = vunpack.c.l.bf16 %v125
    %v142 = vunpack.c.l.bf16 %v126
    %v143 = vunpack.c.l.bf16 %v127
    %v144 = vunpack.c.l.bf16 %v128
    %v145 = vunpack.c.l.bf16 %v129
    %v146 = vunpack.c.l.bf16 %v130
    %v147 = vunpack.c.l.bf16 %v131
    %v148 = vunpack.c.l.bf16 %v132
    %v149 = vld [vmem:[#allocation8] sm:$0xf]
    %v150 = vld [vmem:[#allocation8 + $0x4] sm:$0xf]
    %v151 = vld [vmem:[#allocation8 + $0x8] sm:$0xf]
    %v152 = vld [vmem:[#allocation8 + $0xc] sm:$0xf]
    %v153 = vld [vmem:[#allocation8 + $0x10] sm:$0xf]
    %v154 = vld [vmem:[#allocation8 + $0x14] sm:$0xf]
    %v155 = vld [vmem:[#allocation8 + $0x18] sm:$0xf]
    %v156 = vld [vmem:[#allocation8 + $0x1c] sm:$0xf]
    %v157 = vld [vmem:[#allocation8 + $0x20] sm:$0xf]
    %v158 = vld [vmem:[#allocation8 + $0x24] sm:$0xf]
    %v159 = vld [vmem:[#allocation8 + $0x28] sm:$0xf]
    %v160 = vld [vmem:[#allocation8 + $0x2c] sm:$0xf]
    %v161 = vld [vmem:[#allocation8 + $0x30] sm:$0xf]
    %v162 = vld [vmem:[#allocation8 + $0x34] sm:$0xf]
    %v163 = vld [vmem:[#allocation8 + $0x38] sm:$0xf]
    %v164 = vld [vmem:[#allocation8 + $0x3c] sm:$0xf]
    %v165 = vunpack.c.l.bf16 %v149
    %v166 = vunpack.c.l.bf16 %v150
    %v167 = vunpack.c.l.bf16 %v151
    %v168 = vunpack.c.l.bf16 %v152
    %v169 = vunpack.c.l.bf16 %v153
    %v170 = vunpack.c.l.bf16 %v154
    %v171 = vunpack.c.l.bf16 %v155
    %v172 = vunpack.c.l.bf16 %v156
    %v173 = vunpack.c.l.bf16 %v157
    %v174 = vunpack.c.l.bf16 %v158
    %v175 = vunpack.c.l.bf16 %v159
    %v176 = vunpack.c.l.bf16 %v160
    %v177 = vunpack.c.l.bf16 %v161
    %v178 = vunpack.c.l.bf16 %v162
    %v179 = vunpack.c.l.bf16 %v163
    %v180 = vunpack.c.l.bf16 %v164
    %v181 = vmul.f32 %v133, 0.5
    %v182 = vmul.f32 %v134, 0.5
    %v183 = vmul.f32 %v135, 0.5
    %v184 = vmul.f32 %v136, 0.5
    %v185 = vmul.f32 %v137, 0.5
    %v186 = vmul.f32 %v138, 0.5
    %v187 = vmul.f32 %v139, 0.5
    %v188 = vmul.f32 %v140, 0.5
    %v189 = vmul.f32 %v141, 0.5
    %v190 = vmul.f32 %v142, 0.5
    %v191 = vmul.f32 %v143, 0.5
    %v192 = vmul.f32 %v144, 0.5
    %v193 = vmul.f32 %v145, 0.5
    %v194 = vmul.f32 %v146, 0.5
    %v195 = vmul.f32 %v147, 0.5
    %v196 = vmul.f32 %v148, 0.5
    %v197 = vmul.f32 %v181, 1.442695
    %v198 = vpow.pop %v197
    %v199 = vmul.f32 %v182, 1.442695
    %v200 = vpow.pop %v199
    %v201 = vmul.f32 %v183, 1.442695
    %v202 = vpow.pop %v201
    %v203 = vmul.f32 %v184, 1.442695
    %v204 = vpow.pop %v203
    %v205 = vmul.f32 %v185, 1.442695
    %v206 = vpow.pop %v205
    %v207 = vmul.f32 %v186, 1.442695
    %v208 = vpow.pop %v207
    %v209 = vmul.f32 %v187, 1.442695
    %v210 = vpow.pop %v209
    %v211 = vmul.f32 %v188, 1.442695
    %v212 = vpow.pop %v211
    %v213 = vmul.f32 %v189, 1.442695
    %v214 = vpow.pop %v213
    %v215 = vmul.f32 %v190, 1.442695
    %v216 = vpow.pop %v215
    %v217 = vmul.f32 %v191, 1.442695
    %v218 = vpow.pop %v217
    %v219 = vmul.f32 %v192, 1.442695
    %v220 = vpow.pop %v219
    %v221 = vmul.f32 %v193, 1.442695
    %v222 = vpow.pop %v221
    %v223 = vmul.f32 %v194, 1.442695
    %v224 = vpow.pop %v223
    %v225 = vmul.f32 %v195, 1.442695
    %v226 = vpow.pop %v225
    %v227 = vmul.f32 %v196, 1.442695
    %v228 = vpow.pop %v227
    %v229 = vmul.f32 %v165, %v198
    %v230 = vmul.f32 %v166, %v200
    %v231 = vmul.f32 %v167, %v202
    %v232 = vmul.f32 %v168, %v204
    %v233 = vmul.f32 %v169, %v206
    %v234 = vmul.f32 %v170, %v208
    %v235 = vmul.f32 %v171, %v210
    %v236 = vmul.f32 %v172, %v212
    %v237 = vmul.f32 %v173, %v214
    %v238 = vmul.f32 %v174, %v216
    %v239 = vmul.f32 %v175, %v218
    %v240 = vmul.f32 %v176, %v220
    %v241 = vmul.f32 %v177, %v222
    %v242 = vmul.f32 %v178, %v224
    %v243 = vmul.f32 %v179, %v226
    %v244 = vmul.f32 %v180, %v228
    %v245 = vadd.f32 %v229, %v101
    %v246 = vadd.f32 %v230, %v102
    %v247 = vadd.f32 %v231, %v103
    %v248 = vadd.f32 %v232, %v104
    %v249 = vadd.f32 %v233, %v105
    %v250 = vadd.f32 %v234, %v106
    %v251 = vadd.f32 %v235, %v107
    %v252 = vadd.f32 %v236, %v108
    %v253 = vadd.f32 %v237, %v109
    %v254 = vadd.f32 %v238, %v110
    %v255 = vadd.f32 %v239, %v111
    %v256 = vadd.f32 %v240, %v112
    %v257 = vadd.f32 %v241, %v113
    %v258 = vadd.f32 %v242, %v114
    %v259 = vadd.f32 %v243, %v115
    %v260 = vadd.f32 %v244, %v116
    %v261 = vld [vmem:[#allocation10] sm:$0xff]
    %v262 = vld [vmem:[#allocation2] sm:$0xff]
    %263 = vmatprep.subr.mxu0 0.0
    %264 = vmatpush1.msra.mxu0 %v245
    %265 = vmatprep.subr.mxu0 0.0
    %266 = vmatpush1.msra.mxu0 %v246
    %267 = vmatprep.subr.mxu0 0.0
    %268 = vmatpush1.msra.mxu0 %v247
    %269 = vmatprep.subr.mxu0 0.0
    %270 = vmatpush1.msra.mxu0 %v248
    %271 = vmatprep.subr.mxu0 0.0
    %272 = vmatpush1.msra.mxu0 %v249
    %273 = vmatprep.subr.mxu0 0.0
    %274 = vmatpush1.msra.mxu0 %v250
    %275 = vmatprep.subr.mxu0 0.0
    %276 = vmatpush1.msra.mxu0 %v251
    %277 = vmatprep.subr.mxu0 0.0
    %278 = vmatpush1.msra.mxu0 %v252
    %279 = vmatprep.subr.mxu0 0.0
    %280 = vmatpush1.msra.mxu0 %v253
    %281 = vmatprep.subr.mxu0 0.0
    %282 = vmatpush1.msra.mxu0 %v254
    %283 = vmatprep.subr.mxu0 0.0
    %284 = vmatpush1.msra.mxu0 %v255
    %285 = vmatprep.subr.mxu0 0.0
    %286 = vmatpush1.msra.mxu0 %v256
    %287 = vmatprep.subr.mxu0 0.0
    %288 = vmatpush1.msra.mxu0 %v257
    %289 = vmatprep.subr.mxu0 0.0
    %290 = vmatpush1.msra.mxu0 %v258
    %291 = vmatprep.subr.mxu0 0.0
    %292 = vmatpush1.msra.mxu0 %v259
    %293 = vmatprep.subr.mxu0 0.0
    %294 = vmatpush1.msra.mxu0 %v260
    %295 = vmatprep.subr.mxu0 0.0
    %296 = vmatpush1.msra.mxu0 0.0
    %297 = vmatprep.subr.mxu0 0.0
    %298 = vmatpush1.msra.mxu0 0.0
    %299 = vmatprep.subr.mxu0 0.0
    %300 = vmatpush1.msra.mxu0 0.0
    %301 = vmatprep.subr.mxu0 0.0
    %302 = vmatpush1.msra.mxu0 0.0
    %303 = vmatprep.subr.mxu0 0.0
    %304 = vmatpush1.msra.mxu0 0.0
    %305 = vmatprep.subr.mxu0 0.0
    %306 = vmatpush1.msra.mxu0 0.0
    %307 = vmatprep.subr.mxu0 0.0
    %308 = vmatpush1.msra.mxu0 0.0
    %309 = vmatprep.subr.mxu0 0.0
    %310 = vmatpush1.msra.mxu0 0.0
    %311 = vmatprep.subr.mxu0 0.0
    %312 = vmatpush1.msra.mxu0 0.0
    %313 = vmatprep.subr.mxu0 0.0
    %314 = vmatpush1.msra.mxu0 0.0
    %315 = vmatprep.subr.mxu0 0.0
    %316 = vmatpush1.msra.mxu0 0.0
    %317 = vmatprep.subr.mxu0 0.0
    %318 = vmatpush1.msra.mxu0 0.0
    %319 = vmatprep.subr.mxu0 0.0
    %320 = vmatpush1.msra.mxu0 0.0
    %321 = vmatprep.subr.mxu0 0.0
    %322 = vmatpush1.msra.mxu0 0.0
    %323 = vmatprep.subr.mxu0 0.0
    %324 = vmatpush1.msra.mxu0 0.0
    %325 = vmatprep.subr.mxu0 0.0
    %326 = vmatpush1.msra.mxu0 0.0
    %327 = vmatprep.mubr.f32.mxu0 0.0
    %328 = vmatmul.mubr.f32.gmra.mrb[0].mxu0 %v262
    %v329 = vpop.f32.mrb[0].mxu0
    %v330 = vadd.f32 0.0, %v329
    %v331 = vpop.f32.mrb[0].mxu0
    %332 = vdwg.mxu0
    %v333 = vadd.f32 %v261, %v330
    %334 = vst [vmem:[#allocation10] sm:$0xff] %v333
    // Predicated region
    $region50: #{tpu_custom_call.1} parent=1 // pred_check
      %p335 = pneg %p80
    $region51: #{tpu_custom_call.1} parent=1 // pred_check_branch
      %337 = sbr.rel (%p335) target = $region53
    $region52: #{tpu_custom_call.1} parent=1 // pred_region
      %v338 = vld [vmem:[%s4] sm:$0x1]
      %v339 = vld [vmem:[%s5] sm:$0x1]
      %v340 = vld [vmem:[%s6] sm:$0x1]
      %v341 = vmul.f32 %v339, 0.5
      %v342 = vmul.f32 %v341, 1.442695
      %v343 = vpow.pop %v342
      %v344 = vmul.f32 %v340, %v343
      %v345 = vadd.f32 %v344, %v338
      %v346 = vld [vmem:[#allocation10] sm:$0xff]
      %v348 = vlaneseq
      %v349 = vshrl.u32 %v348, 7
      %v350 = vsub.s32 0, %v349
      %v351 = vrot.slane %v345, %v350
      %v353 = vadd.f32 %v346, %v351
      %v354 = vmax.f32 %v353, 0.0
      %355 = vst [vmem:[#allocation10] sm:$0xff] %v354
    $region53: #{tpu_custom_call.1} parent=1 // pred_fallthru
      _
    // Predicated region
    $region54: #{tpu_custom_call.1} parent=1 // pred_check
      _
    $region55: #{tpu_custom_call.1} parent=1 // pred_check_branch
      %357 = sbr.rel (0) target = $region57
    $region56: #{tpu_custom_call.1} parent=1 // pred_region
      %s359 = ssub.s32 128, 128
      %360 = vsyncadd [#allocation4], %s359
      %s362 = sshll.u32 [#allocation10], 4
      %s363 = int_to_ptr.vmem [resolvable:$true] %s362
      %365 = dma.vmem_to_hbm [thread:$0]  %s363, 128, %s7, [#allocation4]
    $region57: #{tpu_custom_call.1} parent=1 // pred_fallthru
      _
    // Predicated region
    $region58: #{tpu_custom_call.1} parent=1 // pred_check
      _
    $region59: #{tpu_custom_call.1} parent=1 // pred_check_branch
      %367 = sbr.rel (0) target = $region61
    $region60: #{tpu_custom_call.1} parent=1 // pred_region
      %368 = dma.done [#allocation4], 128
    $region61: #{tpu_custom_call.1} parent=1 // pred_fallthru
      _
    %369 = vsyncpa [#allocation3], 1
    %370 = vsyncpa [#allocation6], 1
    %371 = vsyncpa [#allocation9], 1
    %372 = vsyncpa [#allocation4], 1

</llo_original>
